<compile_context>
chip_gen: v7x
topology: tpu7x:2x2x1
jax: 0.10.0
libtpu: 0.0.40
codegen_flags: <defaults>
</compile_context>

<pallas_src>
import functools

import jax
import jax.numpy as jnp
from jax.experimental import pallas as pl
from jax.experimental.pallas import tpu as pltpu


# ----------------------------------------------------------------------------
# Small helpers
# ----------------------------------------------------------------------------
_VMEM_CAP = 44 << 20        # hard cap: below v7x's 64 MiB physical VMEM
_FOOTPRINT_CAP = 36 << 20   # target per-call working set for tile selection


def _round_up(x, m):
    return ((x + m - 1) // m) * m


def _pad2d(x, rows, cols):
    r, c = x.shape
    return jnp.pad(x, ((0, rows - r), (0, cols - c)))


def _largest_tile(n_pad, cap):
    """Largest multiple of 128 that divides n_pad and is <= cap (min 128)."""
    t = (min(cap, n_pad) // 128) * 128
    while t > 128 and n_pad % t != 0:
        t -= 128
    return max(t, 128)


def _clamp_vmem(need_bytes):
    return int(min(max(need_bytes, 16 << 20), _VMEM_CAP))


def _pick_tiles(n_pad, f_out_p, out_elem_bytes):
    """Choose (tm, tk) dividing n_pad: as large as the VMEM budget allows, with
    tm capped at n_pad//2 (n_pad >= 256) so the parallel row axis has >= 2
    blocks for v7x's two TensorCores."""
    tm_cap = 1024
    if n_pad >= 256:
        tm_cap = min(tm_cap, n_pad // 2)
    tm = _largest_tile(n_pad, tm_cap)
    tk = _largest_tile(n_pad, 2048)

    def footprint(tm_, tk_):
        a = 2 * tm_ * tk_                      # int8 A tile, double buffered
        xw = 2 * tk_ * f_out_p * 2             # bf16 XW tile (streamed), double buffered
        out = 2 * tm_ * f_out_p * out_elem_bytes
        acc = tm_ * f_out_p * 4                # f32 accumulator (worst case)
        return a + xw + out + acc + (2 << 20)

    while tk > 128 and footprint(tm, tk) > _FOOTPRINT_CAP:
        tk = _largest_tile(n_pad, tk - 128)
    while tm > 128 and footprint(tm, tk) > _FOOTPRINT_CAP:
        tm = _largest_tile(n_pad, tm - 128)
    return tm, tk


# ----------------------------------------------------------------------------
# Kernel 1: feature projection  XW = X @ W   (row-tiled)
# ----------------------------------------------------------------------------
def _project_kernel(x_ref, w_ref, o_ref):
    o_ref[...] = jnp.dot(
        x_ref[...], w_ref[...], preferred_element_type=jnp.float32
    ).astype(o_ref.dtype)


def gcn_project(x_bf16, w_bf16, *, tm):
    n_pad, f_in_p = x_bf16.shape
    f_out_p = w_bf16.shape[1]
    grid = (n_pad // tm,)
    need = 2 * (tm * f_in_p * 2 + f_in_p * f_out_p * 2 + tm * f_out_p * 2) + (2 << 20)
    return pl.pallas_call(
        _project_kernel,
        out_shape=jax.ShapeDtypeStruct((n_pad, f_out_p), jnp.bfloat16),
        grid_spec=pltpu.PrefetchScalarGridSpec(
            num_scalar_prefetch=0,
            grid=grid,
            in_specs=[
                pl.BlockSpec((tm, f_in_p), lambda i: (i, 0)),
                pl.BlockSpec((f_in_p, f_out_p), lambda i: (0, 0)),
            ],
            out_specs=pl.BlockSpec((tm, f_out_p), lambda i: (i, 0)),
        ),
        compiler_params=pltpu.CompilerParams(
            dimension_semantics=("parallel",),
            vmem_limit_bytes=_clamp_vmem(need),
        ),
        cost_estimate=pl.CostEstimate(
            flops=2 * n_pad * f_in_p * f_out_p,
            transcendentals=0,
            bytes_accessed=n_pad * f_in_p * 2
            + f_in_p * f_out_p * 2
            + n_pad * f_out_p * 2,
        ),
    )(x_bf16, w_bf16)


# ----------------------------------------------------------------------------
# Kernel 2: neighborhood aggregation  out = (A_q * row_scale) @ XW + b (+ ReLU)
# ----------------------------------------------------------------------------
def _aggregate_kernel(a_ref, xw_ref, scale_ref, b_ref, o_ref, *scratch,
                      apply_relu, xw_resident, tk):
    k = pl.program_id(1)
    # f32 output tile doubles as the accumulator (no scratch for the last layer);
    # intermediate (bf16-out) layers get a small f32 scratch accumulator instead.
    acc_ref = scratch[0] if scratch else o_ref

    # Dequantize the int8 adjacency tile to bf16 (VPU; hidden under the A DMA).
    a_bf = a_ref[...].astype(jnp.float32).astype(jnp.bfloat16)

    if xw_resident:
        start = pl.multiple_of(k * tk, 128)
        xw = xw_ref[pl.ds(start, tk), :]
    else:
        xw = xw_ref[...]

    contrib = jnp.dot(a_bf, xw, preferred_element_type=jnp.float32)

    @pl.when(k == 0)
    def _():
        acc_ref[...] = contrib            # first dot: no zero-fill + add

    @pl.when(k > 0)
    def _():
        acc_ref[...] += contrib

    @pl.when(k == pl.num_programs(1) - 1)
    def _():
        out = acc_ref[...] * scale_ref[...] + b_ref[...]   # per-row dequant scale
        if apply_relu:
            out = jnp.maximum(out, 0.0)
        o_ref[...] = out.astype(o_ref.dtype)


def gcn_aggregate(a_q, a_scale, xw_bf16, b_f32, *, tm, tk, apply_relu, out_dtype):
    n_pad = a_q.shape[0]
    f_out_p = xw_bf16.shape[1]
    grid = (n_pad // tm, n_pad // tk)

    out_bytes = jnp.dtype(out_dtype).itemsize
    base = (2 * tm * tk                         # int8 A tiles, double buffered
            + 2 * tm * f_out_p * out_bytes      # output tiles
            + 2 * (tm * 4 + f_out_p * 4)        # scale + bias tiles
            + (2 << 20))                        # headroom
    use_scratch = out_dtype != jnp.float32
    if use_scratch:
        base += tm * f_out_p * 4                # f32 scratch accumulator

    xw_bytes = n_pad * f_out_p * 2
    xw_resident = base + 2 * xw_bytes <= (40 << 20)   # gated against v7x VMEM
    if xw_resident:
        # Full-array block with a constant index_map -> fetched into VMEM once.
        xw_spec = pl.BlockSpec((n_pad, f_out_p), lambda i, k: (0, 0))
        need = base + 2 * xw_bytes
        xw_hbm_reads = xw_bytes
    else:
        xw_spec = pl.BlockSpec((tk, f_out_p), lambda i, k: (k, 0))
        need = base + 2 * tk * f_out_p * 2
        xw_hbm_reads = (n_pad // tm) * xw_bytes

    scratch_shapes = []
    if use_scratch:
        scratch_shapes.append(pltpu.VMEM((tm, f_out_p), jnp.float32))

    kernel = functools.partial(
        _aggregate_kernel, apply_relu=apply_relu, xw_resident=xw_resident, tk=tk)

    return pl.pallas_call(
        kernel,
        out_shape=jax.ShapeDtypeStruct((n_pad, f_out_p), out_dtype),
        grid_spec=pltpu.PrefetchScalarGridSpec(
            num_scalar_prefetch=0,
            grid=grid,
            in_specs=[
                pl.BlockSpec((tm, tk), lambda i, k: (i, k)),
                xw_spec,
                pl.BlockSpec((tm, 1), lambda i, k: (i, 0)),
                pl.BlockSpec((1, f_out_p), lambda i, k: (0, 0)),
            ],
            out_specs=pl.BlockSpec((tm, f_out_p), lambda i, k: (i, 0)),
            scratch_shapes=scratch_shapes,
        ),
        compiler_params=pltpu.CompilerParams(
            dimension_semantics=("parallel", "arbitrary"),
            vmem_limit_bytes=_clamp_vmem(need),
        ),
        cost_estimate=pl.CostEstimate(
            flops=2 * n_pad * n_pad * f_out_p,
            transcendentals=0,
            bytes_accessed=n_pad * n_pad            # int8 A_hat
            + xw_hbm_reads
            + n_pad * f_out_p * out_bytes
            + n_pad * 4 + f_out_p * 4,
        ),
    )(a_q, xw_bf16, a_scale, b_f32)


# ----------------------------------------------------------------------------
# Graph preprocessing (per graph, hoisted out of the forward path)
# ----------------------------------------------------------------------------
def build_gcn_adjacency(edge_index, num_nodes):
    """Dense A_hat = D^{-1/2} (A + I) D^{-1/2}; scatter-ADD so parallel edges
    count (matches torch_geometric's scatter-add normalization)."""
    src, dst = edge_index[0], edge_index[1]
    a = jnp.zeros((num_nodes, num_nodes), jnp.float32)
    a = a.at[dst, src].add(1.0)                       # message j -> i lands in row i
    a = a + jnp.eye(num_nodes, dtype=jnp.float32)     # self loops
    # TODO(synk): torch_geometric's gcn_norm only adds *missing* self loops; graphs
    # with explicit self loops in edge_index would be double-counted here.
    deg = a.sum(axis=1)
    d_inv_sqrt = jnp.where(deg > 0, jax.lax.rsqrt(deg), 0.0)
    return a * d_inv_sqrt[:, None] * d_inv_sqrt[None, :]


def preprocess_graph(edge_index, num_nodes):
    """Normalized adjacency quantized to int8 with per-row scales, padded to a
    multiple of 128 (NOT of tm, avoiding quadratic padding waste). Reused for
    every layer / every forward call on the same graph."""
    n_pad = _round_up(num_nodes, 128)
    a = build_gcn_adjacency(edge_index, num_nodes)
    row_max = jnp.max(a, axis=1, keepdims=True)
    scale = jnp.where(row_max > 0, row_max / 127.0, 1.0)
    a_q = jnp.clip(jnp.round(a / scale), 0, 127).astype(jnp.int8)
    a_q = _pad2d(a_q, n_pad, n_pad)
    scale = jnp.pad(scale, ((0, n_pad - num_nodes), (0, 0)), constant_values=1.0)
    return a_q, scale, n_pad


def init_gnn_encoder_params(key, in_dim, hidden_dim, num_unit):
    """Glorot-uniform weights + zero bias for (num_unit + 1) GCN layers."""
    dims = [(in_dim, hidden_dim)] + [(hidden_dim, hidden_dim)] * num_unit
    params = []
    for fan_in, fan_out in dims:
        key, sub = jax.random.split(key)
        limit = (6.0 / (fan_in + fan_out)) ** 0.5
        w = jax.random.uniform(sub, (fan_in, fan_out), jnp.float32, -limit, limit)
        b = jnp.zeros((1, fan_out), jnp.float32)
        params.append((w, b))
    return params


# ----------------------------------------------------------------------------
# Forward pass
# ----------------------------------------------------------------------------
def gnn_encoder_forward(x, params, a_q, a_scale):
    """GNNEncoder.forward: ReLU on all but the last GCN layer.
    batch_norm=False and dropout=0.0 (module defaults) -> identities."""
    num_nodes, in_dim = x.shape
    hidden_dim = params[0][0].shape[1]
    n_pad = a_q.shape[0]

    f_in_pad = _round_up(in_dim, 8)           # sublane-aligned; no 16x padding of tiny K
    f_hid_pad = _round_up(hidden_dim, 128)    # lane-dense outputs
    tm, tk = _pick_tiles(n_pad, f_hid_pad, 4)

    h = _pad2d(x, n_pad, f_in_pad).astype(jnp.bfloat16)   # single cast of the raw input
    num_layers = len(params)
    for layer_idx, (w, b) in enumerate(params):
        is_last = layer_idx == num_layers - 1
        f_in_cur = f_in_pad if layer_idx == 0 else f_hid_pad
        w_p = _pad2d(w, f_in_cur, f_hid_pad).astype(jnp.bfloat16)
        b_p = jnp.pad(b, ((0, 0), (0, f_hid_pad - b.shape[1])))

        xw = gcn_project(h, w_p, tm=tm)                                  # bf16
        h = gcn_aggregate(a_q, a_scale, xw, b_p, tm=tm, tk=tk,
                          apply_relu=not is_last,
                          out_dtype=jnp.float32 if is_last else jnp.bfloat16)

    return h[:num_nodes, :hidden_dim]


# ----------------------------------------------------------------------------
# Pure-JAX reference mirroring the kernel numerics (int8 A_hat w/ per-row scale,
# bf16 operands, f32 accumulation). Vs a pure-f32 GCN the outputs differ at the
# ~1% level from bf16 + int8-A quantization.
# ----------------------------------------------------------------------------
def gnn_encoder_reference(x, edge_index, params):
    a = build_gcn_adjacency(edge_index, x.shape[0])
    row_max = jnp.max(a, axis=1, keepdims=True)
    scale = jnp.where(row_max > 0, row_max / 127.0, 1.0)
    a_q = jnp.clip(jnp.round(a / scale), 0, 127)
    a_bf = a_q.astype(jnp.bfloat16).astype(jnp.float32)

    h = x.astype(jnp.bfloat16).astype(jnp.float32)
    num_layers = len(params)
    for idx, (w, b) in enumerate(params):
        is_last = idx == num_layers - 1
        w_bf = w.astype(jnp.bfloat16).astype(jnp.float32)
        xw = (h @ w_bf).astype(jnp.bfloat16).astype(jnp.float32)
        h = (a_bf @ xw) * scale + b
        if not is_last:
            h = jnp.maximum(h, 0.0).astype(jnp.bfloat16).astype(jnp.float32)
    return h


if __name__ == "__main__":
    key = jax.random.PRNGKey(0)

    # Small graph: 16 nodes, in_dim=8, hidden_dim=32, num_unit=2 -> 3 GCN layers.
    num_nodes, in_dim, hidden_dim, num_unit = 16, 8, 32, 2

    key, kx, kp = jax.random.split(key, 3)
    x = jax.random.normal(kx, (num_nodes, in_dim), jnp.float32)

    # Deterministic undirected ring + a few chords as edge_index [2, E].
    src = jnp.arange(num_nodes, dtype=jnp.int32)
    dst = (src + 1) % num_nodes
    chord_src = jnp.array([0, 3, 7, 11], dtype=jnp.int32)
    chord_dst = jnp.array([8, 12, 2, 5], dtype=jnp.int32)
    srcs = jnp.concatenate([src, dst, chord_src, chord_dst])
    dsts = jnp.concatenate([dst, src, chord_dst, chord_src])
    edge_index = jnp.stack([srcs, dsts], axis=0)  # [2, 40]

    params = init_gnn_encoder_params(kp, in_dim, hidden_dim, num_unit)

    # Per-graph precompute (hoisted out of the forward path).
    a_q, a_scale, _ = preprocess_graph(edge_index, num_nodes)

    out = gnn_encoder_forward(x, params, a_q, a_scale)
    out = jax.block_until_ready(out)

    ref = gnn_encoder_reference(x, edge_index, params)
    assert out.shape == (num_nodes, hidden_dim)
    max_err = float(jnp.max(jnp.abs(out - ref)))
    assert jnp.allclose(out, ref, atol=1e-2, rtol=1e-2), max_err

    print("KERNEL_OK")
</pallas_src>

<mosaic_0001>
module attributes {stable_mosaic.version = 11 : i64} {
  func.func @_project_kernel(%arg0: i32, %arg1: memref<128x8xbf16, #tpu.memory_space<vmem>>, %arg2: memref<8x128xbf16, #tpu.memory_space<vmem>>, %arg3: memref<128x128xbf16, #tpu.memory_space<vmem>>) attributes {dimension_semantics = [#tpu.dimension_semantics<parallel>], iteration_bounds = array<i64: 1>, scalar_prefetch = 0 : i64, scratch_operands = 0 : i64, tpu.core_type = #tpu.core_type<tc>, window_params = [{transform_indices = @transform_0, window_bounds = array<i64: 128, 8>}, {pipeline_mode = #tpu.pipeline_mode<synchronous>, transform_indices = @transform_1, window_bounds = array<i64: 8, 128>}, {transform_indices = @transform_2, window_bounds = array<i64: 128, 128>}]} {
    %c0 = arith.constant 0 : index
    %c0_0 = arith.constant 0 : index
    %0 = vector.load %arg1[%c0, %c0_0] : memref<128x8xbf16, #tpu.memory_space<vmem>>, vector<128x8xbf16>
    %c0_1 = arith.constant 0 : index
    %c0_2 = arith.constant 0 : index
    %1 = vector.load %arg2[%c0_1, %c0_2] : memref<8x128xbf16, #tpu.memory_space<vmem>>, vector<8x128xbf16>
    %cst = arith.constant dense<0.000000e+00> : vector<128x128xf32>
    %2 = tpu.matmul %0, %1, %cst {dimension_numbers = #tpu.dot_dimension_numbers<[1], [0], [0], [1], [0, 0, 1, 1], [], []>} : vector<128x8xbf16>, vector<8x128xbf16>, vector<128x128xf32> -> vector<128x128xf32>
    %3 = arith.truncf %2 : vector<128x128xf32> to vector<128x128xbf16>
    %c0_3 = arith.constant 0 : index
    %c0_4 = arith.constant 0 : index
    %4 = vector.load %arg3[%c0_3, %c0_4] : memref<128x128xbf16, #tpu.memory_space<vmem>>, vector<128x128xbf16>
    tpu.vector_store %arg3[%c0_3, %c0_4], %3 {strides = array<i32>} : memref<128x128xbf16, #tpu.memory_space<vmem>>, vector<128x128xbf16>,
    return
  }
  func.func @transform_0(%arg0: i32) -> (i32, i32) {
    %c0_i32 = arith.constant 0 : i32
    %c0_i32_0 = arith.constant 0 : i32
    return %arg0, %c0_i32 : i32, i32
  }
  func.func @transform_1(%arg0: i32) -> (i32, i32) {
    %c0_i32 = arith.constant 0 : i32
    %c0_i32_0 = arith.constant 0 : i32
    %c0_i32_1 = arith.constant 0 : i32
    return %c0_i32, %c0_i32_0 : i32, i32
  }
  func.func @transform_2(%arg0: i32) -> (i32, i32) {
    %c0_i32 = arith.constant 0 : i32
    %c0_i32_0 = arith.constant 0 : i32
    return %arg0, %c0_i32 : i32, i32
  }
}

</mosaic_0001>

<llo_original>
// kernel: tpu_custom_call.1
$region0: #{tpu_custom_call.1}
  #allocation0 [shape = 'u32[]', space=smem, size = 0x4, offset = 0x4, fixed_abs, tag = 'smem constant byte address 0x4 - core index']
  #allocation1 [shape = 'u32[144,128]{1,0:T(1,128)}', space=vmem, size = 0x12000, scoped, tag = 'internal scratch']
  %s0 = inlined_call_operand.vmem [shape: bf16[128,8], index: 0, kind: input, shape index: {}]
  %s1 = inlined_call_operand.vmem [shape: bf16[8,128], index: 1, kind: input, shape index: {}]
  %s2 = inlined_call_operand.hbm [shape: bf16[128,128], index: 2, kind: output, shape index: {}]
  %s3 = sld [smem:[#allocation0]]
  $region18: #{tpu_custom_call.1} parent=0
    _
  %s5 = ssub.s32 1, %s3
  %s6 = scalar_select 0, %s5, %s3
  $region1: #{tpu_custom_call.1} parent=0
    #allocation2 [shape = 'u8[32768]{0}', space=vmem, size = 0x8000, scoped, tag = 'output window, operand 0, single buffered']
    #allocation3 [shape = 's32[1]{0}', space=sflag, size = 0x4, scoped, tag = 'scoped memory for tpu_custom_call.1']
    %7 = vsyncpa [#allocation3], 0
    // Predicated region
    $region2: #{tpu_custom_call.1} parent=1 // pred_check
      _
    $region3: #{tpu_custom_call.1} parent=1 // pred_check_branch
      %9 = sbr.rel (0) target = $region5
    $region4: #{tpu_custom_call.1} parent=1 // pred_region
      _
    $region5: #{tpu_custom_call.1} parent=1 // pred_fallthru
      _
    // Predicated region
    $region6: #{tpu_custom_call.1} parent=1 // pred_check
      _
    $region7: #{tpu_custom_call.1} parent=1 // pred_check_branch
      %11 = sbr.rel (0) target = $region9
    $region8: #{tpu_custom_call.1} parent=1 // pred_region
      _
    $region9: #{tpu_custom_call.1} parent=1 // pred_fallthru
      _
    %v13 = vld [vmem:[%s0] sm:$0xf]
    %v14 = vld [vmem:[%s0 + $0x4] sm:$0xf]
    %v15 = vld [vmem:[%s0 + $0x8] sm:$0xf]
    %v16 = vld [vmem:[%s0 + $0xc] sm:$0xf]
    %v17 = vld [vmem:[%s0 + $0x10] sm:$0xf]
    %v18 = vld [vmem:[%s0 + $0x14] sm:$0xf]
    %v19 = vld [vmem:[%s0 + $0x18] sm:$0xf]
    %v20 = vld [vmem:[%s0 + $0x1c] sm:$0xf]
    %v21 = vld [vmem:[%s0 + $0x20] sm:$0xf]
    %v22 = vld [vmem:[%s0 + $0x24] sm:$0xf]
    %v23 = vld [vmem:[%s0 + $0x28] sm:$0xf]
    %v24 = vld [vmem:[%s0 + $0x2c] sm:$0xf]
    %v25 = vld [vmem:[%s0 + $0x30] sm:$0xf]
    %v26 = vld [vmem:[%s0 + $0x34] sm:$0xf]
    %v27 = vld [vmem:[%s0 + $0x38] sm:$0xf]
    %v28 = vld [vmem:[%s0 + $0x3c] sm:$0xf]
    %v29 = vld [vmem:[%s1] sm:$0xf]
    %v46 = vunpack.c.l.b16 %v13
    %v47 = vunpack.c.l.b16 %v14
    %v48 = vunpack.c.l.b16 %v15
    %v49 = vunpack.c.l.b16 %v16
    %v50 = vunpack.c.l.b16 %v17
    %v51 = vunpack.c.l.b16 %v18
    %v52 = vunpack.c.l.b16 %v19
    %v53 = vunpack.c.l.b16 %v20
    %v54 = vunpack.c.l.b16 %v21
    %v55 = vunpack.c.l.b16 %v22
    %v56 = vunpack.c.l.b16 %v23
    %v57 = vunpack.c.l.b16 %v24
    %v58 = vunpack.c.l.b16 %v25
    %v59 = vunpack.c.l.b16 %v26
    %v60 = vunpack.c.l.b16 %v27
    %v61 = vunpack.c.l.b16 %v28
    %v62 = vpack.c.b16 %v47, %v46
    %v63 = vpack.c.b16 %v49, %v48
    %v64 = vpack.c.b16 %v51, %v50
    %v65 = vpack.c.b16 %v53, %v52
    %v66 = vpack.c.b16 %v55, %v54
    %v67 = vpack.c.b16 %v57, %v56
    %v68 = vpack.c.b16 %v59, %v58
    %v69 = vpack.c.b16 %v61, %v60
    %vm70 = vcmask 64512
    %v72 = vsel %vm70, %v62, 0
    %v75 = vsel %vm70, %v63, 0
    %v78 = vsel %vm70, %v64, 0
    %v81 = vsel %vm70, %v65, 0
    %v84 = vsel %vm70, %v66, 0
    %v87 = vsel %vm70, %v67, 0
    %v90 = vsel %vm70, %v68, 0
    %v93 = vsel %vm70, %v69, 0
    %vm95 = vcmask 1043456
    %v97 = vsel %vm95, %v29, 0
    %99 = vmatprep.subr.bf16.mxu0 0
    %100 = vmatpush1.bf16.msra.mxu0 %v97
    %101 = vmatprep.subr.bf16.mxu0 0
    %102 = vmatpush1.bf16.msra.mxu0 0
    %103 = vmatprep.subr.bf16.mxu0 0
    %104 = vmatpush1.bf16.msra.mxu0 0
    %105 = vmatprep.subr.bf16.mxu0 0
    %106 = vmatpush1.bf16.msra.mxu0 0
    %107 = vmatprep.subr.bf16.mxu0 0
    %108 = vmatpush1.bf16.msra.mxu0 0
    %109 = vmatprep.subr.bf16.mxu0 0
    %110 = vmatpush1.bf16.msra.mxu0 0
    %111 = vmatprep.subr.bf16.mxu0 0
    %112 = vmatpush1.bf16.msra.mxu0 0
    %113 = vmatprep.subr.bf16.mxu0 0
    %114 = vmatpush1.bf16.msra.mxu0 0
    %115 = vmatprep.subr.bf16.mxu0 0
    %116 = vmatpush1.bf16.msra.mxu0 0
    %117 = vmatprep.subr.bf16.mxu0 0
    %118 = vmatpush1.bf16.msra.mxu0 0
    %119 = vmatprep.subr.bf16.mxu0 0
    %120 = vmatpush1.bf16.msra.mxu0 0
    %121 = vmatprep.subr.bf16.mxu0 0
    %122 = vmatpush1.bf16.msra.mxu0 0
    %123 = vmatprep.subr.bf16.mxu0 0
    %124 = vmatpush1.bf16.msra.mxu0 0
    %125 = vmatprep.subr.bf16.mxu0 0
    %126 = vmatpush1.bf16.msra.mxu0 0
    %127 = vmatprep.subr.bf16.mxu0 0
    %128 = vmatpush1.bf16.msra.mxu0 0
    %129 = vmatprep.subr.bf16.mxu0 0
    %130 = vmatpush1.bf16.msra.mxu0 0
    %131 = vmatprep.mubr.bf16.mxu0 0
    %132 = vmatmul.mubr.bf16.gmra.mrb[0].mxu0 %v72
    %v133 = vpop.f32.mrb[0].mxu0
    %v134 = vadd.f32 0.0, %v133
    %v135 = vpop.f32.mrb[0].mxu0
    %v136 = vpop.f32.mrb[0].mxu0
    %v137 = vadd.f32 0.0, %v136
    %v138 = vpop.f32.mrb[0].mxu0
    %139 = vmatprep.mubr.bf16.mxu0 0
    %140 = vmatmul.mubr.bf16.gmra.mrb[0].mxu0 %v75
    %v141 = vpop.f32.mrb[0].mxu0
    %v142 = vadd.f32 0.0, %v141
    %v143 = vpop.f32.mrb[0].mxu0
    %v144 = vpop.f32.mrb[0].mxu0
    %v145 = vadd.f32 0.0, %v144
    %v146 = vpop.f32.mrb[0].mxu0
    %147 = vmatprep.mubr.bf16.mxu0 0
    %148 = vmatmul.mubr.bf16.gmra.mrb[0].mxu0 %v78
    %v149 = vpop.f32.mrb[0].mxu0
    %v150 = vadd.f32 0.0, %v149
    %v151 = vpop.f32.mrb[0].mxu0
    %v152 = vpop.f32.mrb[0].mxu0
    %v153 = vadd.f32 0.0, %v152
    %v154 = vpop.f32.mrb[0].mxu0
    %155 = vmatprep.mubr.bf16.mxu0 0
    %156 = vmatmul.mubr.bf16.gmra.mrb[0].mxu0 %v81
    %v157 = vpop.f32.mrb[0].mxu0
    %v158 = vadd.f32 0.0, %v157
    %v159 = vpop.f32.mrb[0].mxu0
    %v160 = vpop.f32.mrb[0].mxu0
    %v161 = vadd.f32 0.0, %v160
    %v162 = vpop.f32.mrb[0].mxu0
    %163 = vmatprep.mubr.bf16.mxu0 0
    %164 = vmatmul.mubr.bf16.gmra.mrb[0].mxu0 %v84
    %v165 = vpop.f32.mrb[0].mxu0
    %v166 = vadd.f32 0.0, %v165
    %v167 = vpop.f32.mrb[0].mxu0
    %v168 = vpop.f32.mrb[0].mxu0
    %v169 = vadd.f32 0.0, %v168
    %v170 = vpop.f32.mrb[0].mxu0
    %171 = vmatprep.mubr.bf16.mxu0 0
    %172 = vmatmul.mubr.bf16.gmra.mrb[0].mxu0 %v87
    %v173 = vpop.f32.mrb[0].mxu0
    %v174 = vadd.f32 0.0, %v173
    %v175 = vpop.f32.mrb[0].mxu0
    %v176 = vpop.f32.mrb[0].mxu0
    %v177 = vadd.f32 0.0, %v176
    %v178 = vpop.f32.mrb[0].mxu0
    %179 = vmatprep.mubr.bf16.mxu0 0
    %180 = vmatmul.mubr.bf16.gmra.mrb[0].mxu0 %v90
    %v181 = vpop.f32.mrb[0].mxu0
    %v182 = vadd.f32 0.0, %v181
    %v183 = vpop.f32.mrb[0].mxu0
    %v184 = vpop.f32.mrb[0].mxu0
    %v185 = vadd.f32 0.0, %v184
    %v186 = vpop.f32.mrb[0].mxu0
    %187 = vmatprep.mubr.bf16.mxu0 0
    %188 = vmatmul.mubr.bf16.gmra.mrb[0].mxu0 %v93
    %v189 = vpop.f32.mrb[0].mxu0
    %v190 = vadd.f32 0.0, %v189
    %v191 = vpop.f32.mrb[0].mxu0
    %v192 = vpop.f32.mrb[0].mxu0
    %v193 = vadd.f32 0.0, %v192
    %v194 = vpop.f32.mrb[0].mxu0
    %195 = vdwg.mxu0
    %v196 = vpack.c.bf16 %v137, %v134
    %v197 = vpack.c.bf16 %v145, %v142
    %v198 = vpack.c.bf16 %v153, %v150
    %v199 = vpack.c.bf16 %v161, %v158
    %v200 = vpack.c.bf16 %v169, %v166
    %v201 = vpack.c.bf16 %v177, %v174
    %v202 = vpack.c.bf16 %v185, %v182
    %v203 = vpack.c.bf16 %v193, %v190
    %v212 = vunpack.c.l.b16 %v196
    %v213 = vunpack.c.h.b16 %v196
    %v214 = vunpack.c.l.b16 %v197
    %v215 = vunpack.c.h.b16 %v197
    %v216 = vunpack.c.l.b16 %v198
    %v217 = vunpack.c.h.b16 %v198
    %v218 = vunpack.c.l.b16 %v199
    %v219 = vunpack.c.h.b16 %v199
    %v220 = vunpack.c.l.b16 %v200
    %v221 = vunpack.c.h.b16 %v200
    %v222 = vunpack.c.l.b16 %v201
    %v223 = vunpack.c.h.b16 %v201
    %v224 = vunpack.c.l.b16 %v202
    %v225 = vunpack.c.h.b16 %v202
    %v226 = vunpack.c.l.b16 %v203
    %v227 = vunpack.c.h.b16 %v203
    %v228 = vpack.c.b16 %v212, %v212
    %v229 = vpack.c.b16 %v213, %v213
    %v230 = vpack.c.b16 %v214, %v214
    %v231 = vpack.c.b16 %v215, %v215
    %v232 = vpack.c.b16 %v216, %v216
    %v233 = vpack.c.b16 %v217, %v217
    %v234 = vpack.c.b16 %v218, %v218
    %v235 = vpack.c.b16 %v219, %v219
    %v236 = vpack.c.b16 %v220, %v220
    %v237 = vpack.c.b16 %v221, %v221
    %v238 = vpack.c.b16 %v222, %v222
    %v239 = vpack.c.b16 %v223, %v223
    %v240 = vpack.c.b16 %v224, %v224
    %v241 = vpack.c.b16 %v225, %v225
    %v242 = vpack.c.b16 %v226, %v226
    %v243 = vpack.c.b16 %v227, %v227
    %260 = vst [vmem:[#allocation2] sm:$0xf] %v228
    %261 = vst [vmem:[#allocation2 + $0x4] sm:$0xf] %v229
    %262 = vst [vmem:[#allocation2 + $0x8] sm:$0xf] %v230
    %263 = vst [vmem:[#allocation2 + $0xc] sm:$0xf] %v231
    %264 = vst [vmem:[#allocation2 + $0x10] sm:$0xf] %v232
    %265 = vst [vmem:[#allocation2 + $0x14] sm:$0xf] %v233
    %266 = vst [vmem:[#allocation2 + $0x18] sm:$0xf] %v234
    %267 = vst [vmem:[#allocation2 + $0x1c] sm:$0xf] %v235
    %268 = vst [vmem:[#allocation2 + $0x20] sm:$0xf] %v236
    %269 = vst [vmem:[#allocation2 + $0x24] sm:$0xf] %v237
    %270 = vst [vmem:[#allocation2 + $0x28] sm:$0xf] %v238
    %271 = vst [vmem:[#allocation2 + $0x2c] sm:$0xf] %v239
    %272 = vst [vmem:[#allocation2 + $0x30] sm:$0xf] %v240
    %273 = vst [vmem:[#allocation2 + $0x34] sm:$0xf] %v241
    %274 = vst [vmem:[#allocation2 + $0x38] sm:$0xf] %v242
    %275 = vst [vmem:[#allocation2 + $0x3c] sm:$0xf] %v243
    // Predicated region
    $region10: #{tpu_custom_call.1} parent=1 // pred_check
      _
    $region11: #{tpu_custom_call.1} parent=1 // pred_check_branch
      %277 = sbr.rel (0) target = $region13
    $region12: #{tpu_custom_call.1} parent=1 // pred_region
      %s279 = ssub.s32 1024, 1024
      %280 = vsyncadd [#allocation3], %s279
      %s281 = sshll.u32 [#allocation2], 4
      %s282 = int_to_ptr.vmem [resolvable:$true] %s281
      %287 = dma.vmem_to_hbm [thread:$0]  %s282, 1024, %s2, [#allocation3], 64, 64, 4
    $region13: #{tpu_custom_call.1} parent=1 // pred_fallthru
      _
    // Predicated region
    $region14: #{tpu_custom_call.1} parent=1 // pred_check
      _
    $region15: #{tpu_custom_call.1} parent=1 // pred_check_branch
      %289 = sbr.rel (0) target = $region17
    $region16: #{tpu_custom_call.1} parent=1 // pred_region
      %290 = dma.done [#allocation3], 1024
    $region17: #{tpu_custom_call.1} parent=1 // pred_fallthru
      _
    %291 = vsyncpa [#allocation3], 1

</llo_original>
